<compile_context>
chip_gen: v5e
topology: v5e:2x2
jax: 0.10.0
libtpu: 0.0.40
codegen_flags: <defaults>
</compile_context>

<pallas_src>
import jax
import jax.numpy as jnp
from jax.experimental import pallas as pl
from jax.experimental.pallas import tpu as pltpu


def _round_up(x: int, m: int) -> int:
    return ((x + m - 1) // m) * m


def _dqn_kernel(x_ref, w1_ref, w2_ref, w3_ref, b1_ref, b2_ref, b3_ref, o_ref):
    """One batch tile of the 3-layer MLP. All operands are single VMEM tiles."""
    x = x_ref[...]                                                    # (TB, S)  f32
    h1 = jnp.dot(x, w1_ref[...], preferred_element_type=jnp.float32) + b1_ref[...]
    h1 = jnp.maximum(h1, 0.0)                                         # (TB, F1)
    h2 = jnp.dot(h1, w2_ref[...], preferred_element_type=jnp.float32) + b2_ref[...]
    h2 = jnp.maximum(h2, 0.0)                                         # (TB, F2)
    out = jnp.dot(h2, w3_ref[...], preferred_element_type=jnp.float32) + b3_ref[...]
    o_ref[...] = out.astype(o_ref.dtype)                              # (TB, A)


def _choose_tile_b(batch: int, tile_b: int) -> int:
    """Pick the batch tile: big tiles to amortize grid-step overhead, >=2 steps when the
    batch allows it (so a 'parallel' axis reaches both v7x TensorCores), and for small
    batches a single full-extent block (no padding, no partial blocks)."""
    tile_b = max(16, _round_up(tile_b, 16))
    if batch >= 2 * tile_b:
        return tile_b
    if batch >= 64:
        return _round_up(pl.cdiv(batch, 2), 16)   # exactly 2 grid steps
    return batch                                   # 1 step; block == full batch dim


def dqn_forward(x, params, *, tile_b: int = 512):
    """DQN MLP forward as a batch-tiled Pallas TPU kernel.

    x:      (B, state_size) float32
    params: dict with w1 (S,F1), w2 (F1,F2), w3 (F2,A) float32 in (in, out) layout
            (i.e. y = x @ W + b, transposed vs. PyTorch) and b1 (1,F1), b2 (1,F2),
            b3 (1,A) float32.  Parameters are already kernel-ready; nothing is padded
            or repacked per call.
    returns (B, action_size) float32
    """
    B, S = x.shape
    w1, w2, w3 = params["w1"], params["w2"], params["w3"]
    b1, b2, b3 = params["b1"], params["b2"], params["b3"]
    F1, F2, A = w1.shape[1], w2.shape[1], w3.shape[1]
    assert w1.shape == (S, F1) and w2.shape == (F1, F2) and w3.shape == (F2, A)
    assert b1.shape == (1, F1) and b2.shape == (1, F2) and b3.shape == (1, A)

    TB = _choose_tile_b(B, tile_b)
    grid = (pl.cdiv(B, TB),)

    flops = 2 * B * (S * F1 + F1 * F2 + F2 * A)
    bytes_accessed = 4 * (x.size + w1.size + w2.size + w3.size
                          + b1.size + b2.size + b3.size + B * A)
    cost = pl.CostEstimate(flops=flops, transcendentals=0, bytes_accessed=bytes_accessed)

    const = lambda i: (0, 0)    # weights / biases: same block every step -> VMEM-resident

    return pl.pallas_call(
        _dqn_kernel,
        out_shape=jax.ShapeDtypeStruct((B, A), jnp.float32),
        grid=grid,
        in_specs=[
            pl.BlockSpec((TB, S), lambda i: (i, 0)),   # x: tiled over batch, S unpadded
            pl.BlockSpec((S, F1), const),
            pl.BlockSpec((F1, F2), const),
            pl.BlockSpec((F2, A), const),
            pl.BlockSpec((1, F1), const),
            pl.BlockSpec((1, F2), const),
            pl.BlockSpec((1, A), const),
        ],
        out_specs=pl.BlockSpec((TB, A), lambda i: (i, 0)),   # direct (B, A) output
        compiler_params=pltpu.CompilerParams(
            dimension_semantics=("parallel",)),              # megacore sharding on v7x
        cost_estimate=cost,
    )(x, w1, w2, w3, b1, b2, b3)


def init_params(key, state_size, fc1_size, fc2_size, action_size):
    """Deterministic init mimicking PyTorch nn.Linear default
    (uniform(-1/sqrt(fan_in), 1/sqrt(fan_in))).  Returned in the kernel-ready layout
    (pre-packing done ONCE here, off the forward hot path)."""
    def linear(key, fan_in, fan_out):
        kw, kb = jax.random.split(key)
        bound = 1.0 / jnp.sqrt(float(fan_in))
        w = jax.random.uniform(kw, (fan_in, fan_out), jnp.float32, -bound, bound)
        b = jax.random.uniform(kb, (1, fan_out), jnp.float32, -bound, bound)
        return w, b

    k1, k2, k3 = jax.random.split(key, 3)
    w1, b1 = linear(k1, state_size, fc1_size)
    w2, b2 = linear(k2, fc1_size, fc2_size)
    w3, b3 = linear(k3, fc2_size, action_size)
    return {"w1": w1, "b1": b1, "w2": w2, "b2": b2, "w3": w3, "b3": b3}


def dqn_reference(x, p):
    """Pure-JAX f32 reference (PyTorch-style semantics)."""
    h1 = jnp.maximum(x @ p["w1"] + p["b1"], 0.0)
    h2 = jnp.maximum(h1 @ p["w2"] + p["b2"], 0.0)
    return h2 @ p["w3"] + p["b3"]


if __name__ == "__main__":
    # Small shapes implied by the module: state vector in, Q-values out.
    batch = 8
    state_size = 32
    fc1_size = 64
    fc2_size = 32
    action_size = 4

    key = jax.random.PRNGKey(0)
    kx, kp, kx2 = jax.random.split(key, 3)

    x = jax.random.normal(kx, (batch, state_size), dtype=jnp.float32)
    params = init_params(kp, state_size, fc1_size, fc2_size, action_size)

    out = dqn_forward(x, params)
    out = jax.block_until_ready(out)
    assert out.shape == (batch, action_size)

    ref = dqn_reference(x, params)
    assert jnp.allclose(out, ref, atol=2e-2, rtol=2e-2), (
        f"max abs diff vs f32 ref: {jnp.max(jnp.abs(out - ref))}")

    # Larger-batch case: exercises the 2-step "parallel" grid (divisible tiles).
    x2 = jax.random.normal(kx2, (192, state_size), dtype=jnp.float32)
    out2 = jax.block_until_ready(dqn_forward(x2, params))
    ref2 = dqn_reference(x2, params)
    assert out2.shape == (192, action_size)
    assert jnp.allclose(out2, ref2, atol=2e-2, rtol=2e-2), (
        f"max abs diff vs f32 ref (B=192): {jnp.max(jnp.abs(out2 - ref2))}")

    print("KERNEL_OK")
</pallas_src>

<mosaic_0001>
module attributes {stable_mosaic.version = 11 : i64} {
  func.func @_dqn_kernel(%arg0: i32, %arg1: memref<8x32xf32, #tpu.memory_space<vmem>>, %arg2: memref<32x64xf32, #tpu.memory_space<vmem>>, %arg3: memref<64x32xf32, #tpu.memory_space<vmem>>, %arg4: memref<32x4xf32, #tpu.memory_space<vmem>>, %arg5: memref<1x64xf32, #tpu.memory_space<vmem>>, %arg6: memref<1x32xf32, #tpu.memory_space<vmem>>, %arg7: memref<1x4xf32, #tpu.memory_space<vmem>>, %arg8: memref<8x4xf32, #tpu.memory_space<vmem>>) attributes {dimension_semantics = [#tpu.dimension_semantics<parallel>], iteration_bounds = array<i64: 1>, scalar_prefetch = 0 : i64, scratch_operands = 0 : i64, tpu.core_type = #tpu.core_type<tc>, window_params = [{transform_indices = @transform_0, window_bounds = array<i64: 8, 32>}, {pipeline_mode = #tpu.pipeline_mode<synchronous>, transform_indices = @transform_1, window_bounds = array<i64: 32, 64>}, {pipeline_mode = #tpu.pipeline_mode<synchronous>, transform_indices = @transform_2, window_bounds = array<i64: 64, 32>}, {pipeline_mode = #tpu.pipeline_mode<synchronous>, transform_indices = @transform_3, window_bounds = array<i64: 32, 4>}, {pipeline_mode = #tpu.pipeline_mode<synchronous>, transform_indices = @transform_4, window_bounds = array<i64: 1, 64>}, {pipeline_mode = #tpu.pipeline_mode<synchronous>, transform_indices = @transform_5, window_bounds = array<i64: 1, 32>}, {pipeline_mode = #tpu.pipeline_mode<synchronous>, transform_indices = @transform_6, window_bounds = array<i64: 1, 4>}, {transform_indices = @transform_7, window_bounds = array<i64: 8, 4>}]} {
    %c0 = arith.constant 0 : index
    %c0_0 = arith.constant 0 : index
    %0 = vector.load %arg1[%c0, %c0_0] : memref<8x32xf32, #tpu.memory_space<vmem>>, vector<8x32xf32>
    %c0_1 = arith.constant 0 : index
    %c0_2 = arith.constant 0 : index
    %1 = vector.load %arg2[%c0_1, %c0_2] : memref<32x64xf32, #tpu.memory_space<vmem>>, vector<32x64xf32>
    %cst = arith.constant dense<0.000000e+00> : vector<8x64xf32>
    %2 = tpu.matmul %0, %1, %cst {dimension_numbers = #tpu.dot_dimension_numbers<[1], [0], [0], [1], [0, 0, 1, 1], [], []>} : vector<8x32xf32>, vector<32x64xf32>, vector<8x64xf32> -> vector<8x64xf32>
    %c0_3 = arith.constant 0 : index
    %c0_4 = arith.constant 0 : index
    %3 = vector.load %arg5[%c0_3, %c0_4] : memref<1x64xf32, #tpu.memory_space<vmem>>, vector<1x64xf32>
    %4 = vector.broadcast %3 : vector<1x64xf32> to vector<8x64xf32>
    %5 = arith.addf %2, %4 : vector<8x64xf32>
    %cst_5 = arith.constant 0.000000e+00 : f32
    %6 = vector.broadcast %cst_5 : f32 to vector<8x64xf32>
    %7 = arith.maximumf %5, %6 : vector<8x64xf32>
    %c0_6 = arith.constant 0 : index
    %c0_7 = arith.constant 0 : index
    %8 = vector.load %arg3[%c0_6, %c0_7] : memref<64x32xf32, #tpu.memory_space<vmem>>, vector<64x32xf32>
    %cst_8 = arith.constant dense<0.000000e+00> : vector<8x32xf32>
    %9 = tpu.matmul %7, %8, %cst_8 {dimension_numbers = #tpu.dot_dimension_numbers<[1], [0], [0], [1], [0, 0, 1, 1], [], []>} : vector<8x64xf32>, vector<64x32xf32>, vector<8x32xf32> -> vector<8x32xf32>
    %c0_9 = arith.constant 0 : index
    %c0_10 = arith.constant 0 : index
    %10 = vector.load %arg6[%c0_9, %c0_10] : memref<1x32xf32, #tpu.memory_space<vmem>>, vector<1x32xf32>
    %11 = vector.broadcast %10 : vector<1x32xf32> to vector<8x32xf32>
    %12 = arith.addf %9, %11 : vector<8x32xf32>
    %cst_11 = arith.constant 0.000000e+00 : f32
    %13 = vector.broadcast %cst_11 : f32 to vector<8x32xf32>
    %14 = arith.maximumf %12, %13 : vector<8x32xf32>
    %c0_12 = arith.constant 0 : index
    %c0_13 = arith.constant 0 : index
    %15 = vector.load %arg4[%c0_12, %c0_13] : memref<32x4xf32, #tpu.memory_space<vmem>>, vector<32x4xf32>
    %cst_14 = arith.constant dense<0.000000e+00> : vector<8x4xf32>
    %16 = tpu.matmul %14, %15, %cst_14 {dimension_numbers = #tpu.dot_dimension_numbers<[1], [0], [0], [1], [0, 0, 1, 1], [], []>} : vector<8x32xf32>, vector<32x4xf32>, vector<8x4xf32> -> vector<8x4xf32>
    %c0_15 = arith.constant 0 : index
    %c0_16 = arith.constant 0 : index
    %17 = vector.load %arg7[%c0_15, %c0_16] : memref<1x4xf32, #tpu.memory_space<vmem>>, vector<1x4xf32>
    %18 = vector.broadcast %17 : vector<1x4xf32> to vector<8x4xf32>
    %19 = arith.addf %16, %18 : vector<8x4xf32>
    %c0_17 = arith.constant 0 : index
    %c0_18 = arith.constant 0 : index
    %20 = vector.load %arg8[%c0_17, %c0_18] : memref<8x4xf32, #tpu.memory_space<vmem>>, vector<8x4xf32>
    tpu.vector_store %arg8[%c0_17, %c0_18], %19 {strides = array<i32>} : memref<8x4xf32, #tpu.memory_space<vmem>>, vector<8x4xf32>,
    return
  }
  func.func @transform_0(%arg0: i32) -> (i32, i32) {
    %c0_i32 = arith.constant 0 : i32
    %c0_i32_0 = arith.constant 0 : i32
    return %arg0, %c0_i32 : i32, i32
  }
  func.func @transform_1(%arg0: i32) -> (i32, i32) {
    %c0_i32 = arith.constant 0 : i32
    %c0_i32_0 = arith.constant 0 : i32
    %c0_i32_1 = arith.constant 0 : i32
    return %c0_i32, %c0_i32_0 : i32, i32
  }
  func.func @transform_2(%arg0: i32) -> (i32, i32) {
    %c0_i32 = arith.constant 0 : i32
    %c0_i32_0 = arith.constant 0 : i32
    %c0_i32_1 = arith.constant 0 : i32
    return %c0_i32, %c0_i32_0 : i32, i32
  }
  func.func @transform_3(%arg0: i32) -> (i32, i32) {
    %c0_i32 = arith.constant 0 : i32
    %c0_i32_0 = arith.constant 0 : i32
    %c0_i32_1 = arith.constant 0 : i32
    return %c0_i32, %c0_i32_0 : i32, i32
  }
  func.func @transform_4(%arg0: i32) -> (i32, i32) {
    %c0_i32 = arith.constant 0 : i32
    %c0_i32_0 = arith.constant 0 : i32
    %c0_i32_1 = arith.constant 0 : i32
    return %c0_i32, %c0_i32_0 : i32, i32
  }
  func.func @transform_5(%arg0: i32) -> (i32, i32) {
    %c0_i32 = arith.constant 0 : i32
    %c0_i32_0 = arith.constant 0 : i32
    %c0_i32_1 = arith.constant 0 : i32
    return %c0_i32, %c0_i32_0 : i32, i32
  }
  func.func @transform_6(%arg0: i32) -> (i32, i32) {
    %c0_i32 = arith.constant 0 : i32
    %c0_i32_0 = arith.constant 0 : i32
    %c0_i32_1 = arith.constant 0 : i32
    return %c0_i32, %c0_i32_0 : i32, i32
  }
  func.func @transform_7(%arg0: i32) -> (i32, i32) {
    %c0_i32 = arith.constant 0 : i32
    %c0_i32_0 = arith.constant 0 : i32
    return %arg0, %c0_i32 : i32, i32
  }
}

</mosaic_0001>

<llo_original>
// kernel: tpu_custom_call.1
$region0: #{tpu_custom_call.1}
  #allocation0 [shape = 'u32[]', space=smem, size = 0x4, offset = 0x4, fixed_abs, tag = 'smem constant byte address 0x4 - core index']
  #allocation1 [shape = 'u32[72,128]{1,0:T(1,128)}', space=vmem, size = 0x9000, scoped, tag = 'internal scratch']
  %s0 = inlined_call_operand.vmem [shape: f32[8,32], index: 0, kind: input, shape index: {}]
  %s1 = inlined_call_operand.vmem [shape: f32[32,64], index: 1, kind: input, shape index: {}]
  %s2 = inlined_call_operand.vmem [shape: f32[64,32], index: 2, kind: input, shape index: {}]
  %s3 = inlined_call_operand.vmem [shape: f32[32,4], index: 3, kind: input, shape index: {}]
  %s4 = inlined_call_operand.vmem [shape: f32[1,64], index: 4, kind: input, shape index: {}]
  %s5 = inlined_call_operand.vmem [shape: f32[1,32], index: 5, kind: input, shape index: {}]
  %s6 = inlined_call_operand.vmem [shape: f32[1,4], index: 6, kind: input, shape index: {}]
  %s7 = inlined_call_operand.vmem [shape: f32[8,4], index: 7, kind: output, shape index: {}]
  %s8 = sld [smem:[#allocation0]]
  $region38: #{tpu_custom_call.1} parent=0
    _
  %s10 = ssub.s32 1, %s8
  %s11 = scalar_select 0, %s10, %s8
  // Predicated region
  $region2: #{tpu_custom_call.1} parent=0 // pred_check
    _
  $region3: #{tpu_custom_call.1} parent=0 // pred_check_branch
    %13 = sbr.rel (0) target = $region5
  $region4: #{tpu_custom_call.1} parent=0 // pred_region
    _
  $region5: #{tpu_custom_call.1} parent=0 // pred_fallthru
    _
  // Predicated region
  $region6: #{tpu_custom_call.1} parent=0 // pred_check
    _
  $region7: #{tpu_custom_call.1} parent=0 // pred_check_branch
    %15 = sbr.rel (0) target = $region9
  $region8: #{tpu_custom_call.1} parent=0 // pred_region
    _
  $region9: #{tpu_custom_call.1} parent=0 // pred_fallthru
    _
  // Predicated region
  $region10: #{tpu_custom_call.1} parent=0 // pred_check
    _
  $region11: #{tpu_custom_call.1} parent=0 // pred_check_branch
    %17 = sbr.rel (0) target = $region13
  $region12: #{tpu_custom_call.1} parent=0 // pred_region
    _
  $region13: #{tpu_custom_call.1} parent=0 // pred_fallthru
    _
  // Predicated region
  $region14: #{tpu_custom_call.1} parent=0 // pred_check
    _
  $region15: #{tpu_custom_call.1} parent=0 // pred_check_branch
    %19 = sbr.rel (0) target = $region17
  $region16: #{tpu_custom_call.1} parent=0 // pred_region
    _
  $region17: #{tpu_custom_call.1} parent=0 // pred_fallthru
    _
  // Predicated region
  $region18: #{tpu_custom_call.1} parent=0 // pred_check
    _
  $region19: #{tpu_custom_call.1} parent=0 // pred_check_branch
    %21 = sbr.rel (0) target = $region21
  $region20: #{tpu_custom_call.1} parent=0 // pred_region
    _
  $region21: #{tpu_custom_call.1} parent=0 // pred_fallthru
    _
  // Predicated region
  $region22: #{tpu_custom_call.1} parent=0 // pred_check
    _
  $region23: #{tpu_custom_call.1} parent=0 // pred_check_branch
    %23 = sbr.rel (0) target = $region25
  $region24: #{tpu_custom_call.1} parent=0 // pred_region
    _
  $region25: #{tpu_custom_call.1} parent=0 // pred_fallthru
    _
  // Predicated region
  $region26: #{tpu_custom_call.1} parent=0 // pred_check
    _
  $region27: #{tpu_custom_call.1} parent=0 // pred_check_branch
    %25 = sbr.rel (0) target = $region29
  $region28: #{tpu_custom_call.1} parent=0 // pred_region
    _
  $region29: #{tpu_custom_call.1} parent=0 // pred_fallthru
    _
  %v26 = vld [vmem:[%s0] sm:$0xff]
  %v27 = vld [vmem:[%s1] sm:$0xff]
  %v28 = vld [vmem:[%s1 + $0x8] sm:$0xff]
  %v29 = vld [vmem:[%s1 + $0x10] sm:$0xff]
  %v30 = vld [vmem:[%s1 + $0x18] sm:$0xff]
  %v31 = vld [vmem:[%s4] sm:$0x1]
  %v33 = vperm.slane %v31, 0
  %vm35 = vcmask 261120
  %v37 = vsel %vm35, %v26, 0
  %39 = vmatpush.msra.mxu0 0.0
  %40 = vmatpush.msra.mxu0 0.0
  %41 = vmatpush.msra.mxu0 0.0
  %42 = vmatpush.msra.mxu0 0.0
  %43 = vmatpush.msra.mxu0 0.0
  %44 = vmatpush.msra.mxu0 0.0
  %45 = vmatpush.msra.mxu0 0.0
  %46 = vmatpush.msra.mxu0 0.0
  %47 = vmatpush.msra.mxu0 0.0
  %48 = vmatpush.msra.mxu0 0.0
  %49 = vmatpush.msra.mxu0 0.0
  %50 = vmatpush.msra.mxu0 0.0
  %51 = vmatpush.msra.mxu0 %v30
  %52 = vmatpush.msra.mxu0 %v29
  %53 = vmatpush.msra.mxu0 %v28
  %54 = vmatpush.msra.mxu0 %v27
  %55 = vmatmul.f32.gmra.mxu0 %v37
  %v56 = vpop.f32.mrf.mxu0
  %v57 = vadd.f32 %v33, %v56
  %58 = vdwg.mxu0
  %v59 = vmax.f32 %v57, 0.0
  %v60 = vld [vmem:[%s2] sm:$0xff]
  %v61 = vld [vmem:[%s2 + $0x8] sm:$0xff]
  %v62 = vld [vmem:[%s2 + $0x10] sm:$0xff]
  %v63 = vld [vmem:[%s2 + $0x18] sm:$0xff]
  %v64 = vld [vmem:[%s2 + $0x20] sm:$0xff]
  %v65 = vld [vmem:[%s2 + $0x28] sm:$0xff]
  %v66 = vld [vmem:[%s2 + $0x30] sm:$0xff]
  %v67 = vld [vmem:[%s2 + $0x38] sm:$0xff]
  %v68 = vld [vmem:[%s5] sm:$0x1]
  %v70 = vperm.slane %v68, 0
  %vm72 = vcmask 523264
  %v74 = vsel %vm72, %v59, 0
  %76 = vmatpush.msra.mxu0 0.0
  %77 = vmatpush.msra.mxu0 0.0
  %78 = vmatpush.msra.mxu0 0.0
  %79 = vmatpush.msra.mxu0 0.0
  %80 = vmatpush.msra.mxu0 0.0
  %81 = vmatpush.msra.mxu0 0.0
  %82 = vmatpush.msra.mxu0 0.0
  %83 = vmatpush.msra.mxu0 0.0
  %84 = vmatpush.msra.mxu0 %v67
  %85 = vmatpush.msra.mxu0 %v66
  %86 = vmatpush.msra.mxu0 %v65
  %87 = vmatpush.msra.mxu0 %v64
  %88 = vmatpush.msra.mxu0 %v63
  %89 = vmatpush.msra.mxu0 %v62
  %90 = vmatpush.msra.mxu0 %v61
  %91 = vmatpush.msra.mxu0 %v60
  %92 = vmatmul.f32.gmra.mxu0 %v74
  %v93 = vpop.f32.mrf.mxu0
  %v94 = vadd.f32 %v70, %v93
  %95 = vdwg.mxu0
  %v96 = vmax.f32 %v94, 0.0
  %v97 = vld [vmem:[%s3] sm:$0xff]
  %v98 = vld [vmem:[%s3 + $0x8] sm:$0xff]
  %v99 = vld [vmem:[%s3 + $0x10] sm:$0xff]
  %v100 = vld [vmem:[%s3 + $0x18] sm:$0xff]
  %v101 = vld [vmem:[%s6] sm:$0x1]
  %v103 = vperm.slane %v101, 0
  %v106 = vsel %vm35, %v96, 0
  %108 = vmatpush.msra.mxu0 0.0
  %109 = vmatpush.msra.mxu0 0.0
  %110 = vmatpush.msra.mxu0 0.0
  %111 = vmatpush.msra.mxu0 0.0
  %112 = vmatpush.msra.mxu0 0.0
  %113 = vmatpush.msra.mxu0 0.0
  %114 = vmatpush.msra.mxu0 0.0
  %115 = vmatpush.msra.mxu0 0.0
  %116 = vmatpush.msra.mxu0 0.0
  %117 = vmatpush.msra.mxu0 0.0
  %118 = vmatpush.msra.mxu0 0.0
  %119 = vmatpush.msra.mxu0 0.0
  %120 = vmatpush.msra.mxu0 %v100
  %121 = vmatpush.msra.mxu0 %v99
  %122 = vmatpush.msra.mxu0 %v98
  %123 = vmatpush.msra.mxu0 %v97
  %124 = vmatmul.f32.gmra.mxu0 %v106
  %v125 = vpop.f32.mrf.mxu0
  %v126 = vadd.f32 %v103, %v125
  %127 = vdwg.mxu0
  %vm128 = vcmask 31744
  %129 = vst.msk [vmem:[%s7] sm:$0xff] %vm128, %v126
  // Predicated region
  $region30: #{tpu_custom_call.1} parent=0 // pred_check
    _
  $region31: #{tpu_custom_call.1} parent=0 // pred_check_branch
    %131 = sbr.rel (0) target = $region33
  $region32: #{tpu_custom_call.1} parent=0 // pred_region
    _
  $region33: #{tpu_custom_call.1} parent=0 // pred_fallthru
    _
  // Predicated region
  $region34: #{tpu_custom_call.1} parent=0 // pred_check
    _
  $region35: #{tpu_custom_call.1} parent=0 // pred_check_branch
    %133 = sbr.rel (0) target = $region37
  $region36: #{tpu_custom_call.1} parent=0 // pred_region
    _
  $region37: #{tpu_custom_call.1} parent=0 // pred_fallthru
    _

</llo_original>
